<compile_context>
chip_gen: v7x
topology: tpu7x:2x2x1
jax: 0.10.0
libtpu: 0.0.40
codegen_flags: <defaults>
</compile_context>

<pallas_src>
import functools

import jax
import jax.numpy as jnp
from jax.experimental import pallas as pl
from jax.experimental.pallas import tpu as pltpu


_VMEM_LIMIT = 48 * 1024 * 1024   # fits v7x 64 MiB physical VMEM with headroom
_LANE = 128
_TILE_TOKENS = 256               # token rows per grid step (distill kernel)
_TILE_ROWS = 512                 # rows per grid step (reconstruction MSE)


def _cdiv(a, b):
    return -(-a // b)


def _round_up(a, b):
    return _cdiv(a, b) * b


def _pad2d(x, rows, cols):
    r, c = x.shape
    if r == rows and c == cols:
        return x
    return jnp.pad(x, ((0, rows - r), (0, cols - c)))


# ----------------------------------------------------------------------------
# Kernel 1: fused teacher forward + distillation loss (KL-div or token MSE).
# Emits per-tile partial sums; normalization is done outside.
# ----------------------------------------------------------------------------
def _distill_kernel(patches_ref, wt_ref, bt_ref, hint_ref, feat_ref, out_ref,
                    *, n_rows, d_valid, mse_token):
    tile_m = patches_ref.shape[0]
    d_pad = feat_ref.shape[1]

    # Teacher (synthetic patch-embed): bf16 x bf16 on the MXU, f32 accumulate.
    token_t = jnp.dot(patches_ref[...], wt_ref[...],
                      preferred_element_type=jnp.float32)
    token_t = (token_t + bt_ref[...]) * hint_ref[...]

    feat = feat_ref[...].astype(jnp.float32)

    # Masks for padded token rows / padded hidden columns.
    row0 = pl.program_id(0) * tile_m
    row_ids = row0 + jax.lax.broadcasted_iota(jnp.int32, (tile_m, d_pad), 0)
    col_ids = jax.lax.broadcasted_iota(jnp.int32, (tile_m, d_pad), 1)
    row_ok = row_ids < n_rows
    col_ok = col_ids < d_valid
    valid = jnp.logical_and(row_ok, col_ok)

    if mse_token:
        diff = feat - token_t
        contrib = jnp.where(valid, diff * diff, 0.0)
    else:
        # log_softmax over the *valid* hidden columns only (f32 math).
        neg = jnp.float32(-1e30)
        f_m = jnp.where(col_ok, feat, neg)
        t_m = jnp.where(col_ok, token_t, neg)
        lf = f_m - jnp.max(f_m, axis=-1, keepdims=True)
        lf = lf - jnp.log(jnp.sum(jnp.exp(lf), axis=-1, keepdims=True))
        lt = t_m - jnp.max(t_m, axis=-1, keepdims=True)
        lt = lt - jnp.log(jnp.sum(jnp.exp(lt), axis=-1, keepdims=True))
        # kl_div(log_target=True) summand: exp(lt) * (lt - lf)
        contrib = jnp.where(valid, jnp.exp(lt) * (lt - lf), 0.0)

    # Per-tile partial sum kept vreg-shaped (8, d_pad): reducing the leading
    # axis is plain elementwise VPU adds across vreg row-groups.  The final
    # cross-lane/sublane reduce happens once, in JAX, on a tiny array.
    partial = jnp.sum(contrib.reshape(tile_m // 8, 8, d_pad), axis=0)
    out_ref[...] = partial[None, :, :]


def distill_loss_sum_pallas(patches, wt, bt, hint, feat2d, *, mse_token):
    """Returns the un-normalized sum of the distillation loss over tokens."""
    n_rows, k = patches.shape
    d = feat2d.shape[1]
    k_pad = _round_up(k, _LANE)
    d_pad = _round_up(d, _LANE)
    tile_m = min(_TILE_TOKENS, _round_up(n_rows, 16))
    rows_pad = _round_up(n_rows, tile_m)
    grid = (rows_pad // tile_m,)

    patches_p = _pad2d(patches, rows_pad, k_pad)           # bf16
    wt_p = _pad2d(wt, k_pad, d_pad)                        # bf16, resident
    bt_p = _pad2d(bt, 1, d_pad).astype(jnp.float32)        # f32, resident
    hint_p = _pad2d(hint, rows_pad, 1).astype(jnp.float32)
    feat_p = _pad2d(feat2d, rows_pad, d_pad)               # original dtype

    kernel = functools.partial(_distill_kernel, n_rows=n_rows, d_valid=d,
                               mse_token=mse_token)
    partials = pl.pallas_call(
        kernel,
        out_shape=jax.ShapeDtypeStruct((grid[0], 8, d_pad), jnp.float32),
        grid=grid,
        in_specs=[
            pl.BlockSpec((tile_m, k_pad), lambda i: (i, 0)),   # patches tile
            pl.BlockSpec((k_pad, d_pad), lambda i: (0, 0)),    # Wt (resident)
            pl.BlockSpec((1, d_pad), lambda i: (0, 0)),        # bias (resident)
            pl.BlockSpec((tile_m, 1), lambda i: (i, 0)),       # hint column
            pl.BlockSpec((tile_m, d_pad), lambda i: (i, 0)),   # features tile
        ],
        out_specs=pl.BlockSpec((1, 8, d_pad), lambda i: (i, 0, 0)),
        compiler_params=pltpu.CompilerParams(
            dimension_semantics=("parallel",),
            vmem_limit_bytes=_VMEM_LIMIT),
    )(patches_p, wt_p, bt_p, hint_p, feat_p)
    return jnp.sum(partials)


# ----------------------------------------------------------------------------
# Kernel 2: reconstruction loss (base_criterion == MSE, mean reduction).
# Inputs are reshaped lane/sublane-dense; both operands are zero-padded so
# the padded elements contribute exactly 0 (no in-kernel mask needed).
# ----------------------------------------------------------------------------
def _mse_kernel(pred_ref, tgt_ref, out_ref):
    tile_r, cols = pred_ref.shape
    d = pred_ref[...].astype(jnp.float32) - tgt_ref[...].astype(jnp.float32)
    partial = jnp.sum((d * d).reshape(tile_r // 8, 8, cols), axis=0)
    out_ref[...] = partial[None, :, :]


def reconstruct_loss_pallas(pred, target):
    total = int(pred.size)
    cols = _LANE
    rows = _cdiv(total, cols)
    tile_r = min(_TILE_ROWS, _round_up(rows, 16))
    rows_pad = _round_up(rows, tile_r)
    padded = rows_pad * cols

    def prep(x):
        flat = x.reshape(-1)
        flat = jnp.pad(flat, (0, padded - total))
        return flat.reshape(rows_pad, cols)

    p2, t2 = prep(pred), prep(target)
    grid = (rows_pad // tile_r,)
    partials = pl.pallas_call(
        _mse_kernel,
        out_shape=jax.ShapeDtypeStruct((grid[0], 8, cols), jnp.float32),
        grid=grid,
        in_specs=[pl.BlockSpec((tile_r, cols), lambda i: (i, 0)),
                  pl.BlockSpec((tile_r, cols), lambda i: (i, 0))],
        out_specs=pl.BlockSpec((1, 8, cols), lambda i: (i, 0, 0)),
        compiler_params=pltpu.CompilerParams(
            dimension_semantics=("parallel",),
            vmem_limit_bytes=_VMEM_LIMIT),
    )(p2, t2)
    return jnp.sum(partials) / float(total)


# ----------------------------------------------------------------------------
# Module wrapper mirroring DistillDiffPruningLoss_dynamic.forward
# ----------------------------------------------------------------------------
class DistillDiffPruningLossDynamic:
    def __init__(self, teacher_w, teacher_b, patch=4,
                 reconstruct_weight=1.0, sparsity_weight=1.0,
                 distill_weight=1.0, mse_token=False,
                 flops_ratio=1.0, flops_ratio2=1.0):
        # Teacher weight lives in bf16 in HBM (halves HBM bytes, MXU-native);
        # bias stays f32 (tiny, resident).
        self.teacher_w = teacher_w.astype(jnp.bfloat16)   # [C*P*P, D]
        self.teacher_b = teacher_b.astype(jnp.float32)    # [1, D]
        self.patch = patch
        self.reconstruct_weight = reconstruct_weight
        self.sparsity_weight = sparsity_weight
        self.distill_weight = distill_weight
        self.mse_token = mse_token
        self.flops_ratio = flops_ratio
        self.flops_ratio2 = flops_ratio2

    def __call__(self, inputs, outputs, mask, labels):
        features, output = outputs
        layer_mask, token_mask, bool_hinted_pos = mask

        # sparsity loss: trivial scalar elementwise math, stays in JAX glue.
        sparsity_loss = (layer_mask - self.flops_ratio) ** 2
        sparsity_loss = sparsity_loss + (token_mask - self.flops_ratio2) ** 2

        # reconstruction loss: base_criterion(output, labels) == MSE(mean).
        rec = reconstruct_loss_pallas(output, labels)

        # teacher input: NCHW -> non-overlapping P x P patches -> [B*N, C*P*P].
        Bi, C, H, W = inputs.shape
        P = self.patch
        nH, nW = H // P, W // P
        patches = (inputs.reshape(Bi, C, nH, P, nW, P)
                   .transpose(0, 2, 4, 1, 3, 5)
                   .reshape(Bi * nH * nW, C * P * P))
        patches = jax.lax.stop_gradient(patches).astype(jnp.bfloat16)
        hint = jax.lax.stop_gradient(
            bool_hinted_pos.reshape(-1, 1).astype(jnp.float32))
        feat2d = features.reshape(-1, features.shape[-1])

        token_sum = distill_loss_sum_pallas(
            patches, self.teacher_w, self.teacher_b, hint, feat2d,
            mse_token=self.mse_token)
        if self.mse_token:
            # torch.pow(features - token_t, 2).mean(): mean over B*N*D elems.
            token_kl_loss = token_sum / float(feat2d.shape[0] * feat2d.shape[1])
        else:
            # F.kl_div(reduction='batchmean') divides by input.size(0) of the
            # 3-D features tensor, i.e. the batch size B (not B*N).
            token_kl_loss = token_sum / float(features.shape[0])

        loss = (self.reconstruct_weight * rec
                + self.sparsity_weight * sparsity_loss
                + self.distill_weight * token_kl_loss)
        return loss


if __name__ == "__main__":
    key = jax.random.PRNGKey(0)
    ks = jax.random.split(key, 8)

    B, C, H, W, P = 2, 4, 16, 16, 4
    N = (H // P) * (W // P)     # 16 tokens per image
    D = 32                      # hidden dim
    Cout = 2                    # colorization (a,b) channels

    inputs = jax.random.normal(ks[0], (B, C, H, W), jnp.float32)        # NCHW
    features = jax.random.normal(ks[1], (B, N, D), jnp.float32)
    output = jax.random.normal(ks[2], (B, Cout, H, W), jnp.float32)     # NCHW
    labels = jax.random.normal(ks[3], (B, Cout, H, W), jnp.float32)     # NCHW
    layer_mask = jnp.float32(0.6)
    token_mask = jnp.float32(0.5)
    bool_hinted_pos = jax.random.bernoulli(ks[4], 0.5, (B, N))

    # deterministic synthetic teacher parameters (patch-embed linear layer)
    teacher_w = jax.random.normal(ks[5], (C * P * P, D), jnp.float32) * 0.05
    teacher_b = jax.random.normal(ks[6], (1, D), jnp.float32) * 0.05

    loss_mod = DistillDiffPruningLossDynamic(
        teacher_w, teacher_b, patch=P,
        reconstruct_weight=1.0, sparsity_weight=2.0, distill_weight=0.5,
        mse_token=False, flops_ratio=0.7, flops_ratio2=0.7)

    loss = loss_mod(inputs, (features, output),
                    (layer_mask, token_mask, bool_hinted_pos), labels)
    jax.block_until_ready(loss)
    print("KERNEL_OK")
</pallas_src>

<mosaic_0001>
module attributes {stable_mosaic.version = 11 : i64} {
  func.func @_mse_kernel(%arg0: i32, %arg1: memref<16x128xf32, #tpu.memory_space<vmem>>, %arg2: memref<16x128xf32, #tpu.memory_space<vmem>>, %arg3: memref<1x8x128xf32, #tpu.memory_space<vmem>>) attributes {dimension_semantics = [#tpu.dimension_semantics<parallel>], iteration_bounds = array<i64: 1>, scalar_prefetch = 0 : i64, scratch_operands = 0 : i64, tpu.core_type = #tpu.core_type<tc>, window_params = [{transform_indices = @transform_0, window_bounds = array<i64: 16, 128>}, {transform_indices = @transform_1, window_bounds = array<i64: 16, 128>}, {transform_indices = @transform_2, window_bounds = array<i64: 1, 8, 128>}]} {
    %c0 = arith.constant 0 : index
    %c0_0 = arith.constant 0 : index
    %0 = vector.load %arg1[%c0, %c0_0] : memref<16x128xf32, #tpu.memory_space<vmem>>, vector<16x128xf32>
    %c0_1 = arith.constant 0 : index
    %c0_2 = arith.constant 0 : index
    %1 = vector.load %arg2[%c0_1, %c0_2] : memref<16x128xf32, #tpu.memory_space<vmem>>, vector<16x128xf32>
    %2 = arith.subf %0, %1 : vector<16x128xf32>
    %3 = arith.mulf %2, %2 : vector<16x128xf32>
    %4 = vector.shape_cast %3 : vector<16x128xf32> to vector<2x8x128xf32>
    %cst = arith.constant dense<0.000000e+00> : vector<8x128xf32>
    %5 = vector.multi_reduction <add>, %4, %cst [0] : vector<2x8x128xf32> to vector<8x128xf32>
    %6 = vector.shape_cast %5 : vector<8x128xf32> to vector<1x8x128xf32>
    %c0_3 = arith.constant 0 : index
    %c0_4 = arith.constant 0 : index
    %c0_5 = arith.constant 0 : index
    %7 = vector.load %arg3[%c0_3, %c0_4, %c0_5] : memref<1x8x128xf32, #tpu.memory_space<vmem>>, vector<1x8x128xf32>
    tpu.vector_store %arg3[%c0_3, %c0_4, %c0_5], %6 {strides = array<i32>} : memref<1x8x128xf32, #tpu.memory_space<vmem>>, vector<1x8x128xf32>,
    return
  }
  func.func @transform_0(%arg0: i32) -> (i32, i32) {
    %c0_i32 = arith.constant 0 : i32
    %c0_i32_0 = arith.constant 0 : i32
    return %arg0, %c0_i32 : i32, i32
  }
  func.func @transform_1(%arg0: i32) -> (i32, i32) {
    %c0_i32 = arith.constant 0 : i32
    %c0_i32_0 = arith.constant 0 : i32
    return %arg0, %c0_i32 : i32, i32
  }
  func.func @transform_2(%arg0: i32) -> (i32, i32, i32) {
    %c0_i32 = arith.constant 0 : i32
    %c0_i32_0 = arith.constant 0 : i32
    %c0_i32_1 = arith.constant 0 : i32
    return %arg0, %c0_i32, %c0_i32_0 : i32, i32, i32
  }
}

</mosaic_0001>

<llo_original>
// kernel: tpu_custom_call.1
$region0: #{tpu_custom_call.1}
  #allocation0 [shape = 'u32[]', space=smem, size = 0x4, offset = 0x4, fixed_abs, tag = 'smem constant byte address 0x4 - core index']
  #allocation1 [shape = 'u32[144,128]{1,0:T(1,128)}', space=vmem, size = 0x12000, scoped, tag = 'internal scratch']
  %s0 = inlined_call_operand.hbm [shape: f32[16,128], index: 0, kind: input, shape index: {}]
  %s1 = inlined_call_operand.hbm [shape: f32[16,128], index: 1, kind: input, shape index: {}]
  %s2 = inlined_call_operand.hbm [shape: f32[1,8,128], index: 2, kind: output, shape index: {}]
  %s3 = sld [smem:[#allocation0]]
  $region26: #{tpu_custom_call.1} parent=0
    _
  %s5 = ssub.s32 1, %s3
  %s6 = scalar_select 0, %s5, %s3
  $region1: #{tpu_custom_call.1} parent=0
    #allocation2 [shape = 'u8[8192]{0}', space=vmem, size = 0x2000, scoped, tag = 'input window, operand 0, single buffered']
    #allocation3 [shape = 's32[1]{0}', space=sflag, size = 0x4, scoped, tag = 'scoped memory for tpu_custom_call.1']
    #allocation4 [shape = 's32[1]{0}', space=sflag, size = 0x4, scoped, tag = 'scoped memory for tpu_custom_call.1']
    #allocation5 [shape = 'u8[8192]{0}', space=vmem, size = 0x2000, scoped, tag = 'input window, operand 1, single buffered']
    #allocation6 [shape = 's32[1]{0}', space=sflag, size = 0x4, scoped, tag = 'scoped memory for tpu_custom_call.1']
    #allocation7 [shape = 'u8[4096]{0}', space=vmem, size = 0x1000, scoped, tag = 'output window, operand 0, single buffered']
    %7 = vsyncpa [#allocation3], 0
    %8 = vsyncpa [#allocation6], 0
    %9 = vsyncpa [#allocation4], 0
    // Predicated region
    $region2: #{tpu_custom_call.1} parent=1 // pred_check
      _
    $region3: #{tpu_custom_call.1} parent=1 // pred_check_branch
      %11 = sbr.rel (0) target = $region5
    $region4: #{tpu_custom_call.1} parent=1 // pred_region
      %s13 = ssub.s32 256, 256
      %14 = vsyncadd [#allocation3], %s13
      %s15 = sshll.u32 [#allocation2], 4
      %s16 = int_to_ptr.vmem [resolvable:$true] %s15
      %21 = dma.hbm_to_vmem [thread:$0]  %s0, 256, %s16, [#allocation3], 128, 128, 8
    $region5: #{tpu_custom_call.1} parent=1 // pred_fallthru
      _
    // Predicated region
    $region6: #{tpu_custom_call.1} parent=1 // pred_check
      _
    $region7: #{tpu_custom_call.1} parent=1 // pred_check_branch
      %23 = sbr.rel (0) target = $region9
    $region8: #{tpu_custom_call.1} parent=1 // pred_region
      %s25 = ssub.s32 256, 256
      %26 = vsyncadd [#allocation6], %s25
      %s27 = sshll.u32 [#allocation5], 4
      %s28 = int_to_ptr.vmem [resolvable:$true] %s27
      %33 = dma.hbm_to_vmem [thread:$0]  %s1, 256, %s28, [#allocation6], 128, 128, 8
    $region9: #{tpu_custom_call.1} parent=1 // pred_fallthru
      _
    // Predicated region
    $region10: #{tpu_custom_call.1} parent=1 // pred_check
      _
    $region11: #{tpu_custom_call.1} parent=1 // pred_check_branch
      %35 = sbr.rel (0) target = $region13
    $region12: #{tpu_custom_call.1} parent=1 // pred_region
      %36 = dma.done [#allocation3], 256
    $region13: #{tpu_custom_call.1} parent=1 // pred_fallthru
      _
    // Predicated region
    $region14: #{tpu_custom_call.1} parent=1 // pred_check
      _
    $region15: #{tpu_custom_call.1} parent=1 // pred_check_branch
      %38 = sbr.rel (0) target = $region17
    $region16: #{tpu_custom_call.1} parent=1 // pred_region
      %39 = dma.done [#allocation6], 256
    $region17: #{tpu_custom_call.1} parent=1 // pred_fallthru
      _
    %v40 = vld [vmem:[#allocation2] sm:$0xff]
    %v41 = vld [vmem:[#allocation2 + $0x8] sm:$0xff]
    %v42 = vld [vmem:[#allocation5] sm:$0xff]
    %v43 = vld [vmem:[#allocation5 + $0x8] sm:$0xff]
    %v44 = vsub.f32 %v40, %v42
    %v45 = vsub.f32 %v41, %v43
    %v46 = vmul.f32 %v44, %v44
    %v47 = vmul.f32 %v45, %v45
    %v48 = vadd.f32 %v46, %v47
    %49 = vst [vmem:[#allocation7] sm:$0xff] %v48
    // Predicated region
    $region18: #{tpu_custom_call.1} parent=1 // pred_check
      _
    $region19: #{tpu_custom_call.1} parent=1 // pred_check_branch
      %51 = sbr.rel (0) target = $region21
    $region20: #{tpu_custom_call.1} parent=1 // pred_region
      %s53 = ssub.s32 128, 128
      %54 = vsyncadd [#allocation4], %s53
      %s56 = sshll.u32 [#allocation7], 4
      %s57 = int_to_ptr.vmem [resolvable:$true] %s56
      %59 = dma.vmem_to_hbm [thread:$0]  %s57, 128, %s2, [#allocation4]
    $region21: #{tpu_custom_call.1} parent=1 // pred_fallthru
      _
    // Predicated region
    $region22: #{tpu_custom_call.1} parent=1 // pred_check
      _
    $region23: #{tpu_custom_call.1} parent=1 // pred_check_branch
      %61 = sbr.rel (0) target = $region25
    $region24: #{tpu_custom_call.1} parent=1 // pred_region
      %62 = dma.done [#allocation4], 128
    $region25: #{tpu_custom_call.1} parent=1 // pred_fallthru
      _
    %63 = vsyncpa [#allocation3], 1
    %64 = vsyncpa [#allocation6], 1
    %65 = vsyncpa [#allocation4], 1

</llo_original>
